<compile_context>
chip_gen: v5e
topology: v5e:2x2
jax: 0.10.0
libtpu: 0.0.40
codegen_flags: <defaults>
</compile_context>

<pallas_src>
import jax
import jax.numpy as jnp
from jax.experimental import pallas as pl
from jax.experimental.pallas import tpu as pltpu


def _round_up(x, m):
    return (x + m - 1) // m * m


def vae_kernel(
    x_ref, eps_ref,            # (TB, D) f32, (TB, L) f32
    ew1_ref, eb1_ref,          # (D, Hp)  bf16, (1, Hp) f32
    ehw_ref, ehb_ref,          # fused heads [mean|logvar]: (Hp, 2L) bf16, (1, 2L) f32
    dw1_ref, db1_ref,          # (L, Hp)  bf16, (1, Hp) f32
    dw2_ref, db2_ref,          # (Hp, D)  bf16, (1, D)  f32
    out_ref,                   # (TB, Wp) bf16 packed: [x_reconst | mean | logvar | 0-pad]
):
    cdt = ew1_ref.dtype                       # bf16 compute dtype for the MXU
    TB = x_ref.shape[0]
    D = x_ref.shape[1]
    L = eps_ref.shape[1]

    x = x_ref[...].astype(cdt)                # in-kernel cast (no wrapper HBM copy)

    # ---- Encoder ----
    h = jnp.dot(x, ew1_ref[...], preferred_element_type=jnp.float32) + eb1_ref[...]
    h = jnp.maximum(h, 0.0)                   # ReLU in f32

    # fused mean / logvar heads: one MXU pass, natural width 2L
    heads = jnp.dot(h.astype(cdt), ehw_ref[...],
                    preferred_element_type=jnp.float32) + ehb_ref[...]
    z_mean = heads[:, :L]
    z_logvar = heads[:, L:]

    # ---- Reparameterization (f32): z = mu + exp(logvar/2) * eps ----
    z = z_mean + jnp.exp(z_logvar * 0.5) * eps_ref[...]

    # ---- Decoder ----
    hd = jnp.dot(z.astype(cdt), dw1_ref[...],
                 preferred_element_type=jnp.float32) + db1_ref[...]
    hd = jnp.maximum(hd, 0.0)
    logits = jnp.dot(hd.astype(cdt), dw2_ref[...],
                     preferred_element_type=jnp.float32) + db2_ref[...]
    x_reconst = jax.nn.sigmoid(logits)

    # ---- Single lane-dense bf16 store of the minimal-width packed slab ----
    parts = [x_reconst.astype(out_ref.dtype), heads.astype(out_ref.dtype)]
    pad_w = out_ref.shape[1] - (D + 2 * L)
    if pad_w:
        parts.append(jnp.zeros((TB, pad_w), out_ref.dtype))
    out_ref[...] = jnp.concatenate(parts, axis=-1)


def init_params(key, input_dim, hidden_dim, latent_dim):
    """Logical (unpadded, f32) params; weights stored transposed to (in, out)."""
    def linear(k, fan_in, fan_out):
        kw, kb = jax.random.split(k)
        bound = 1.0 / jnp.sqrt(fan_in)
        w = jax.random.uniform(kw, (fan_in, fan_out), jnp.float32, -bound, bound)
        b = jax.random.uniform(kb, (1, fan_out), jnp.float32, -bound, bound)
        return w, b

    keys = jax.random.split(key, 5)
    ew1, eb1 = linear(keys[0], input_dim, hidden_dim)
    ew2, eb2 = linear(keys[1], hidden_dim, latent_dim)
    ew3, eb3 = linear(keys[2], hidden_dim, latent_dim)
    dw1, db1 = linear(keys[3], latent_dim, hidden_dim)
    dw2, db2 = linear(keys[4], hidden_dim, input_dim)
    return dict(ew1=ew1, eb1=eb1, ew2=ew2, eb2=eb2, ew3=ew3, eb3=eb3,
                dw1=dw1, db1=db1, dw2=dw2, db2=db2)


def prepare_params(params, compute_dtype=jnp.bfloat16):
    """One-time prep: pad ONLY the hidden dim to a multiple of 128 (lane-dense
    intermediates), fuse the two encoder heads into one (Hp, 2L) weight, and
    cast matmul weights to bf16 (biases stay f32).  Streamed dims (D, L) keep
    their natural width.  Zero padding keeps padded lanes inert."""
    D, H = params["ew1"].shape
    L = params["ew2"].shape[1]
    Hp = _round_up(H, 128)

    def pad_h_cols(a):   # (in, H) -> (in, Hp)
        return jnp.pad(a, ((0, 0), (0, Hp - H)))

    def pad_h_rows(a):   # (H, out) -> (Hp, out)
        return jnp.pad(a, ((0, Hp - H), (0, 0)))

    ew1 = pad_h_cols(params["ew1"]).astype(compute_dtype)                 # (D, Hp)
    eb1 = pad_h_cols(params["eb1"]).astype(jnp.float32)                   # (1, Hp)
    ehw = pad_h_rows(jnp.concatenate([params["ew2"], params["ew3"]], axis=1)
                     ).astype(compute_dtype)                              # (Hp, 2L)
    ehb = jnp.concatenate([params["eb2"], params["eb3"]], axis=1
                          ).astype(jnp.float32)                           # (1, 2L)
    dw1 = pad_h_cols(params["dw1"]).astype(compute_dtype)                 # (L, Hp)
    db1 = pad_h_cols(params["db1"]).astype(jnp.float32)                   # (1, Hp)
    dw2 = pad_h_rows(params["dw2"]).astype(compute_dtype)                 # (Hp, D)
    db2 = params["db2"].astype(jnp.float32)                               # (1, D)

    return dict(ew1=ew1, eb1=eb1, ehw=ehw, ehb=ehb,
                dw1=dw1, db1=db1, dw2=dw2, db2=db2,
                dims=(D, H, L, Hp))


def vae_forward(x, kparams, eps, *, tile_b=1024):
    """x: (B, input_dim) f32, eps: (B, latent_dim) f32.
    Returns (x_reconst, z_mean, z_log_var), all f32, natural shapes."""
    B, D = x.shape
    L = eps.shape[1]
    D_, H, L_, Hp = kparams["dims"]
    assert D == D_ and L == L_
    cdt = kparams["ew1"].dtype

    # Batch tile: multiple of 16 (bf16 sublane tile), capped so batch
    # over-padding stays small, and <= ceil(B/2) so the "parallel" batch axis
    # gets >= 2 grid steps whenever B allows it (v7x dual-TC sharding).
    TB = max(16, min(_round_up(tile_b, 16), _round_up(pl.cdiv(B, 2), 16)))
    Bp = _round_up(B, TB)
    grid = (Bp // TB,)

    if Bp > B:  # only a ragged batch pays a (row-only) wrapper pad copy
        x = jnp.pad(x, ((0, Bp - B), (0, 0)))
        eps = jnp.pad(eps, ((0, Bp - B), (0, 0)))

    Wp = _round_up(D + 2 * L, 128)      # minimal lane-dense packed output width

    def batch_spec(cols):
        return pl.BlockSpec((TB, cols), lambda i: (i, 0))

    def const_spec(rows, cols):         # constant index_map -> VMEM-resident
        return pl.BlockSpec((rows, cols), lambda i: (0, 0))

    in_specs = [
        batch_spec(D),                              # x   (f32, natural width)
        batch_spec(L),                              # eps (f32, natural width)
        const_spec(D, Hp),     const_spec(1, Hp),   # ew1, eb1
        const_spec(Hp, 2 * L), const_spec(1, 2 * L),# ehw, ehb (fused heads)
        const_spec(L, Hp),     const_spec(1, Hp),   # dw1, db1
        const_spec(Hp, D),     const_spec(1, D),    # dw2, db2
    ]
    out_spec = pl.BlockSpec((TB, Wp), lambda i: (i, 0))

    wbytes = jnp.dtype(cdt).itemsize
    weight_bytes = ((D * Hp + Hp * 2 * L + L * Hp + Hp * D) * wbytes
                    + (2 * Hp + 2 * L + D) * 4)
    io_bytes = Bp * (D + L) * 4 + Bp * Wp * 2
    cost = pl.CostEstimate(
        flops=2 * Bp * (D * Hp + Hp * 2 * L + L * Hp + Hp * D),
        transcendentals=Bp * (L + D),           # exp (reparam) + sigmoid
        bytes_accessed=weight_bytes + io_bytes,
    )

    out = pl.pallas_call(
        vae_kernel,
        out_shape=jax.ShapeDtypeStruct((Bp, Wp), jnp.bfloat16),
        grid_spec=pltpu.PrefetchScalarGridSpec(
            num_scalar_prefetch=0,
            grid=grid,
            in_specs=in_specs,
            out_specs=out_spec,
        ),
        compiler_params=pltpu.CompilerParams(
            dimension_semantics=("parallel",),      # megacore / v7x 2-TC sharding
            vmem_limit_bytes=32 * 1024 * 1024,      # ample for TB<=2048 at these dims
        ),
        cost_estimate=cost,
    )(x, eps,
      kparams["ew1"], kparams["eb1"], kparams["ehw"], kparams["ehb"],
      kparams["dw1"], kparams["db1"], kparams["dw2"], kparams["db2"])

    x_reconst = out[:B, :D].astype(jnp.float32)
    z_mean = out[:B, D:D + L].astype(jnp.float32)
    z_logvar = out[:B, D + L:D + 2 * L].astype(jnp.float32)
    return x_reconst, z_mean, z_logvar


def reference_forward(x, params, eps):
    """Pure-JAX f32 reference of the same forward pass (correctness check)."""
    h = jnp.maximum(x @ params["ew1"] + params["eb1"], 0.0)
    z_mean = h @ params["ew2"] + params["eb2"]
    z_logvar = h @ params["ew3"] + params["eb3"]
    z = z_mean + jnp.exp(z_logvar * 0.5) * eps
    hd = jnp.maximum(z @ params["dw1"] + params["db1"], 0.0)
    xr = jax.nn.sigmoid(hd @ params["dw2"] + params["db2"])
    return xr, z_mean, z_logvar


if __name__ == "__main__":
    # Small shapes consistent with the module (latent_dim=20 from the spec).
    B, INPUT_DIM, HIDDEN_DIM, LATENT_DIM = 8, 64, 32, 20

    key = jax.random.PRNGKey(0)
    k_x, k_eps, k_p = jax.random.split(key, 3)

    x = jax.random.uniform(k_x, (B, INPUT_DIM), jnp.float32)       # "image" in [0,1)
    eps = jax.random.normal(k_eps, (B, LATENT_DIM), jnp.float32)   # torch.randn_like
    params = init_params(k_p, INPUT_DIM, HIDDEN_DIM, LATENT_DIM)
    kparams = prepare_params(params)

    xr, z_mean, z_logvar = vae_forward(x, kparams, eps)
    jax.block_until_ready((xr, z_mean, z_logvar))

    # Sanity check vs pure-f32 JAX reference (bf16 matmuls + bf16 packed
    # output store -> loose tolerance; acceptable for a VAE forward).
    xr_ref, mean_ref, logvar_ref = reference_forward(x, params, eps)
    assert xr.shape == (B, INPUT_DIM)
    assert z_mean.shape == (B, LATENT_DIM)
    assert z_logvar.shape == (B, LATENT_DIM)
    assert jnp.allclose(xr, xr_ref, atol=2e-2, rtol=2e-2)
    assert jnp.allclose(z_mean, mean_ref, atol=2e-2, rtol=2e-2)
    assert jnp.allclose(z_logvar, logvar_ref, atol=2e-2, rtol=2e-2)

    print("KERNEL_OK")
</pallas_src>

<mosaic_0001>
module attributes {stable_mosaic.version = 11 : i64} {
  func.func @vae_kernel(%arg0: i32, %arg1: memref<16x64xf32, #tpu.memory_space<vmem>>, %arg2: memref<16x20xf32, #tpu.memory_space<vmem>>, %arg3: memref<64x128xbf16, #tpu.memory_space<vmem>>, %arg4: memref<1x128xf32, #tpu.memory_space<vmem>>, %arg5: memref<128x40xbf16, #tpu.memory_space<vmem>>, %arg6: memref<1x40xf32, #tpu.memory_space<vmem>>, %arg7: memref<20x128xbf16, #tpu.memory_space<vmem>>, %arg8: memref<1x128xf32, #tpu.memory_space<vmem>>, %arg9: memref<128x64xbf16, #tpu.memory_space<vmem>>, %arg10: memref<1x64xf32, #tpu.memory_space<vmem>>, %arg11: memref<16x128xbf16, #tpu.memory_space<vmem>>) attributes {dimension_semantics = [#tpu.dimension_semantics<parallel>], iteration_bounds = array<i64: 1>, scalar_prefetch = 0 : i64, scratch_operands = 0 : i64, tpu.core_type = #tpu.core_type<tc>, window_params = [{transform_indices = @transform_0, window_bounds = array<i64: 16, 64>}, {transform_indices = @transform_1, window_bounds = array<i64: 16, 20>}, {pipeline_mode = #tpu.pipeline_mode<synchronous>, transform_indices = @transform_2, window_bounds = array<i64: 64, 128>}, {pipeline_mode = #tpu.pipeline_mode<synchronous>, transform_indices = @transform_3, window_bounds = array<i64: 1, 128>}, {pipeline_mode = #tpu.pipeline_mode<synchronous>, transform_indices = @transform_4, window_bounds = array<i64: 128, 40>}, {pipeline_mode = #tpu.pipeline_mode<synchronous>, transform_indices = @transform_5, window_bounds = array<i64: 1, 40>}, {pipeline_mode = #tpu.pipeline_mode<synchronous>, transform_indices = @transform_6, window_bounds = array<i64: 20, 128>}, {pipeline_mode = #tpu.pipeline_mode<synchronous>, transform_indices = @transform_7, window_bounds = array<i64: 1, 128>}, {pipeline_mode = #tpu.pipeline_mode<synchronous>, transform_indices = @transform_8, window_bounds = array<i64: 128, 64>}, {pipeline_mode = #tpu.pipeline_mode<synchronous>, transform_indices = @transform_9, window_bounds = array<i64: 1, 64>}, {transform_indices = @transform_10, window_bounds = array<i64: 16, 128>}]} {
    %c0 = arith.constant 0 : index
    %c0_0 = arith.constant 0 : index
    %0 = vector.load %arg1[%c0, %c0_0] : memref<16x64xf32, #tpu.memory_space<vmem>>, vector<16x64xf32>
    %1 = arith.truncf %0 : vector<16x64xf32> to vector<16x64xbf16>
    %c0_1 = arith.constant 0 : index
    %c0_2 = arith.constant 0 : index
    %2 = vector.load %arg3[%c0_1, %c0_2] : memref<64x128xbf16, #tpu.memory_space<vmem>>, vector<64x128xbf16>
    %cst = arith.constant dense<0.000000e+00> : vector<16x128xf32>
    %3 = tpu.matmul %1, %2, %cst {dimension_numbers = #tpu.dot_dimension_numbers<[1], [0], [0], [1], [0, 0, 1, 1], [], []>} : vector<16x64xbf16>, vector<64x128xbf16>, vector<16x128xf32> -> vector<16x128xf32>
    %c0_3 = arith.constant 0 : index
    %c0_4 = arith.constant 0 : index
    %4 = vector.load %arg4[%c0_3, %c0_4] : memref<1x128xf32, #tpu.memory_space<vmem>>, vector<1x128xf32>
    %5 = vector.broadcast %4 : vector<1x128xf32> to vector<16x128xf32>
    %6 = arith.addf %3, %5 : vector<16x128xf32>
    %cst_5 = arith.constant 0.000000e+00 : f32
    %7 = vector.broadcast %cst_5 : f32 to vector<16x128xf32>
    %8 = arith.maximumf %6, %7 : vector<16x128xf32>
    %9 = arith.truncf %8 : vector<16x128xf32> to vector<16x128xbf16>
    %c0_6 = arith.constant 0 : index
    %c0_7 = arith.constant 0 : index
    %10 = vector.load %arg5[%c0_6, %c0_7] : memref<128x40xbf16, #tpu.memory_space<vmem>>, vector<128x40xbf16>
    %cst_8 = arith.constant dense<0.000000e+00> : vector<16x40xf32>
    %11 = tpu.matmul %9, %10, %cst_8 {dimension_numbers = #tpu.dot_dimension_numbers<[1], [0], [0], [1], [0, 0, 1, 1], [], []>} : vector<16x128xbf16>, vector<128x40xbf16>, vector<16x40xf32> -> vector<16x40xf32>
    %c0_9 = arith.constant 0 : index
    %c0_10 = arith.constant 0 : index
    %12 = vector.load %arg6[%c0_9, %c0_10] : memref<1x40xf32, #tpu.memory_space<vmem>>, vector<1x40xf32>
    %13 = vector.broadcast %12 : vector<1x40xf32> to vector<16x40xf32>
    %14 = arith.addf %11, %13 : vector<16x40xf32>
    %15 = vector.extract_strided_slice %14 {offsets = [0, 0], sizes = [16, 20], strides = [1, 1]} : vector<16x40xf32> to vector<16x20xf32>
    %16 = vector.extract_strided_slice %14 {offsets = [0, 20], sizes = [16, 20], strides = [1, 1]} : vector<16x40xf32> to vector<16x20xf32>
    %cst_11 = arith.constant 5.000000e-01 : f32
    %17 = vector.broadcast %cst_11 : f32 to vector<16x20xf32>
    %18 = arith.mulf %16, %17 : vector<16x20xf32>
    %19 = math.exp %18 : vector<16x20xf32>
    %c0_12 = arith.constant 0 : index
    %c0_13 = arith.constant 0 : index
    %20 = vector.load %arg2[%c0_12, %c0_13] : memref<16x20xf32, #tpu.memory_space<vmem>>, vector<16x20xf32>
    %21 = arith.mulf %19, %20 : vector<16x20xf32>
    %22 = arith.addf %15, %21 : vector<16x20xf32>
    %23 = arith.truncf %22 : vector<16x20xf32> to vector<16x20xbf16>
    %c0_14 = arith.constant 0 : index
    %c0_15 = arith.constant 0 : index
    %24 = vector.load %arg7[%c0_14, %c0_15] : memref<20x128xbf16, #tpu.memory_space<vmem>>, vector<20x128xbf16>
    %cst_16 = arith.constant dense<0.000000e+00> : vector<16x128xf32>
    %25 = tpu.matmul %23, %24, %cst_16 {dimension_numbers = #tpu.dot_dimension_numbers<[1], [0], [0], [1], [0, 0, 1, 1], [], []>} : vector<16x20xbf16>, vector<20x128xbf16>, vector<16x128xf32> -> vector<16x128xf32>
    %c0_17 = arith.constant 0 : index
    %c0_18 = arith.constant 0 : index
    %26 = vector.load %arg8[%c0_17, %c0_18] : memref<1x128xf32, #tpu.memory_space<vmem>>, vector<1x128xf32>
    %27 = vector.broadcast %26 : vector<1x128xf32> to vector<16x128xf32>
    %28 = arith.addf %25, %27 : vector<16x128xf32>
    %cst_19 = arith.constant 0.000000e+00 : f32
    %29 = vector.broadcast %cst_19 : f32 to vector<16x128xf32>
    %30 = arith.maximumf %28, %29 : vector<16x128xf32>
    %31 = arith.truncf %30 : vector<16x128xf32> to vector<16x128xbf16>
    %c0_20 = arith.constant 0 : index
    %c0_21 = arith.constant 0 : index
    %32 = vector.load %arg9[%c0_20, %c0_21] : memref<128x64xbf16, #tpu.memory_space<vmem>>, vector<128x64xbf16>
    %cst_22 = arith.constant dense<0.000000e+00> : vector<16x64xf32>
    %33 = tpu.matmul %31, %32, %cst_22 {dimension_numbers = #tpu.dot_dimension_numbers<[1], [0], [0], [1], [0, 0, 1, 1], [], []>} : vector<16x128xbf16>, vector<128x64xbf16>, vector<16x64xf32> -> vector<16x64xf32>
    %c0_23 = arith.constant 0 : index
    %c0_24 = arith.constant 0 : index
    %34 = vector.load %arg10[%c0_23, %c0_24] : memref<1x64xf32, #tpu.memory_space<vmem>>, vector<1x64xf32>
    %35 = vector.broadcast %34 : vector<1x64xf32> to vector<16x64xf32>
    %36 = arith.addf %33, %35 : vector<16x64xf32>
    %37 = arith.negf %36 : vector<16x64xf32>
    %38 = math.exp %37 : vector<16x64xf32>
    %cst_25 = arith.constant 1.000000e+00 : f32
    %39 = vector.broadcast %cst_25 : f32 to vector<16x64xf32>
    %40 = arith.addf %39, %38 : vector<16x64xf32>
    %41 = arith.divf %39, %40 : vector<16x64xf32>
    %42 = arith.truncf %41 : vector<16x64xf32> to vector<16x64xbf16>
    %43 = arith.truncf %14 : vector<16x40xf32> to vector<16x40xbf16>
    %cst_26 = arith.constant 0.000000e+00 : bf16
    %44 = vector.broadcast %cst_26 : bf16 to vector<16x24xbf16>
    %45 = tpu.concatenate %42, %43, %44 in 1 : vector<16x64xbf16>, vector<16x40xbf16>, vector<16x24xbf16> -> vector<16x128xbf16>
    %c0_27 = arith.constant 0 : index
    %c0_28 = arith.constant 0 : index
    %46 = vector.load %arg11[%c0_27, %c0_28] : memref<16x128xbf16, #tpu.memory_space<vmem>>, vector<16x128xbf16>
    tpu.vector_store %arg11[%c0_27, %c0_28], %45 {strides = array<i32>} : memref<16x128xbf16, #tpu.memory_space<vmem>>, vector<16x128xbf16>,
    return
  }
  func.func @transform_0(%arg0: i32) -> (i32, i32) {
    %c0_i32 = arith.constant 0 : i32
    %c0_i32_0 = arith.constant 0 : i32
    return %arg0, %c0_i32 : i32, i32
  }
  func.func @transform_1(%arg0: i32) -> (i32, i32) {
    %c0_i32 = arith.constant 0 : i32
    %c0_i32_0 = arith.constant 0 : i32
    return %arg0, %c0_i32 : i32, i32
  }
  func.func @transform_2(%arg0: i32) -> (i32, i32) {
    %c0_i32 = arith.constant 0 : i32
    %c0_i32_0 = arith.constant 0 : i32
    %c0_i32_1 = arith.constant 0 : i32
    return %c0_i32, %c0_i32_0 : i32, i32
  }
  func.func @transform_3(%arg0: i32) -> (i32, i32) {
    %c0_i32 = arith.constant 0 : i32
    %c0_i32_0 = arith.constant 0 : i32
    %c0_i32_1 = arith.constant 0 : i32
    return %c0_i32, %c0_i32_0 : i32, i32
  }
  func.func @transform_4(%arg0: i32) -> (i32, i32) {
    %c0_i32 = arith.constant 0 : i32
    %c0_i32_0 = arith.constant 0 : i32
    %c0_i32_1 = arith.constant 0 : i32
    return %c0_i32, %c0_i32_0 : i32, i32
  }
  func.func @transform_5(%arg0: i32) -> (i32, i32) {
    %c0_i32 = arith.constant 0 : i32
    %c0_i32_0 = arith.constant 0 : i32
    %c0_i32_1 = arith.constant 0 : i32
    return %c0_i32, %c0_i32_0 : i32, i32
  }
  func.func @transform_6(%arg0: i32) -> (i32, i32) {
    %c0_i32 = arith.constant 0 : i32
    %c0_i32_0 = arith.constant 0 : i32
    %c0_i32_1 = arith.constant 0 : i32
    return %c0_i32, %c0_i32_0 : i32, i32
  }
  func.func @transform_7(%arg0: i32) -> (i32, i32) {
    %c0_i32 = arith.constant 0 : i32
    %c0_i32_0 = arith.constant 0 : i32
    %c0_i32_1 = arith.constant 0 : i32
    return %c0_i32, %c0_i32_0 : i32, i32
  }
  func.func @transform_8(%arg0: i32) -> (i32, i32) {
    %c0_i32 = arith.constant 0 : i32
    %c0_i32_0 = arith.constant 0 : i32
    %c0_i32_1 = arith.constant 0 : i32
    return %c0_i32, %c0_i32_0 : i32, i32
  }
  func.func @transform_9(%arg0: i32) -> (i32, i32) {
    %c0_i32 = arith.constant 0 : i32
    %c0_i32_0 = arith.constant 0 : i32
    %c0_i32_1 = arith.constant 0 : i32
    return %c0_i32, %c0_i32_0 : i32, i32
  }
  func.func @transform_10(%arg0: i32) -> (i32, i32) {
    %c0_i32 = arith.constant 0 : i32
    %c0_i32_0 = arith.constant 0 : i32
    return %arg0, %c0_i32 : i32, i32
  }
}

</mosaic_0001>

<llo_original>
// kernel: tpu_custom_call.1
$region0: #{tpu_custom_call.1}
  #allocation0 [shape = 'u32[]', space=smem, size = 0x4, offset = 0x4, fixed_abs, tag = 'smem constant byte address 0x4 - core index']
  #allocation1 [shape = 'u32[72,128]{1,0:T(1,128)}', space=vmem, size = 0x9000, scoped, tag = 'internal scratch']
  %s0 = inlined_call_operand.vmem [shape: f32[16,64], index: 0, kind: input, shape index: {}]
  %s1 = inlined_call_operand.vmem [shape: f32[16,20], index: 1, kind: input, shape index: {}]
  %s2 = inlined_call_operand.vmem [shape: bf16[64,128], index: 2, kind: input, shape index: {}]
  %s3 = inlined_call_operand.vmem [shape: f32[1,128], index: 3, kind: input, shape index: {}]
  %s4 = inlined_call_operand.vmem [shape: bf16[128,40], index: 4, kind: input, shape index: {}]
  %s5 = inlined_call_operand.vmem [shape: f32[1,40], index: 5, kind: input, shape index: {}]
  %s6 = inlined_call_operand.vmem [shape: bf16[20,128], index: 6, kind: input, shape index: {}]
  %s7 = inlined_call_operand.vmem [shape: f32[1,128], index: 7, kind: input, shape index: {}]
  %s8 = inlined_call_operand.vmem [shape: bf16[128,64], index: 8, kind: input, shape index: {}]
  %s9 = inlined_call_operand.vmem [shape: f32[1,64], index: 9, kind: input, shape index: {}]
  %s10 = inlined_call_operand.hbm [shape: bf16[16,128], index: 10, kind: output, shape index: {}]
  %s11 = sld [smem:[#allocation0]]
  $region50: #{tpu_custom_call.1} parent=0
    _
  %s13 = ssub.s32 1, %s11
  %s14 = scalar_select 0, %s13, %s11
  $region1: #{tpu_custom_call.1} parent=0
    #allocation2 [shape = 'u8[4096]{0}', space=vmem, size = 0x1000, scoped, tag = 'output window, operand 0, single buffered']
    #allocation3 [shape = 's32[1]{0}', space=sflag, size = 0x4, scoped, tag = 'scoped memory for tpu_custom_call.1']
    %15 = vsyncpa [#allocation3], 0
    // Predicated region
    $region2: #{tpu_custom_call.1} parent=1 // pred_check
      _
    $region3: #{tpu_custom_call.1} parent=1 // pred_check_branch
      %17 = sbr.rel (0) target = $region5
    $region4: #{tpu_custom_call.1} parent=1 // pred_region
      _
    $region5: #{tpu_custom_call.1} parent=1 // pred_fallthru
      _
    // Predicated region
    $region6: #{tpu_custom_call.1} parent=1 // pred_check
      _
    $region7: #{tpu_custom_call.1} parent=1 // pred_check_branch
      %19 = sbr.rel (0) target = $region9
    $region8: #{tpu_custom_call.1} parent=1 // pred_region
      _
    $region9: #{tpu_custom_call.1} parent=1 // pred_fallthru
      _
    // Predicated region
    $region10: #{tpu_custom_call.1} parent=1 // pred_check
      _
    $region11: #{tpu_custom_call.1} parent=1 // pred_check_branch
      %21 = sbr.rel (0) target = $region13
    $region12: #{tpu_custom_call.1} parent=1 // pred_region
      _
    $region13: #{tpu_custom_call.1} parent=1 // pred_fallthru
      _
    // Predicated region
    $region14: #{tpu_custom_call.1} parent=1 // pred_check
      _
    $region15: #{tpu_custom_call.1} parent=1 // pred_check_branch
      %23 = sbr.rel (0) target = $region17
    $region16: #{tpu_custom_call.1} parent=1 // pred_region
      _
    $region17: #{tpu_custom_call.1} parent=1 // pred_fallthru
      _
    // Predicated region
    $region18: #{tpu_custom_call.1} parent=1 // pred_check
      _
    $region19: #{tpu_custom_call.1} parent=1 // pred_check_branch
      %25 = sbr.rel (0) target = $region21
    $region20: #{tpu_custom_call.1} parent=1 // pred_region
      _
    $region21: #{tpu_custom_call.1} parent=1 // pred_fallthru
      _
    // Predicated region
    $region22: #{tpu_custom_call.1} parent=1 // pred_check
      _
    $region23: #{tpu_custom_call.1} parent=1 // pred_check_branch
      %27 = sbr.rel (0) target = $region25
    $region24: #{tpu_custom_call.1} parent=1 // pred_region
      _
    $region25: #{tpu_custom_call.1} parent=1 // pred_fallthru
      _
    // Predicated region
    $region26: #{tpu_custom_call.1} parent=1 // pred_check
      _
    $region27: #{tpu_custom_call.1} parent=1 // pred_check_branch
      %29 = sbr.rel (0) target = $region29
    $region28: #{tpu_custom_call.1} parent=1 // pred_region
      _
    $region29: #{tpu_custom_call.1} parent=1 // pred_fallthru
      _
    // Predicated region
    $region30: #{tpu_custom_call.1} parent=1 // pred_check
      _
    $region31: #{tpu_custom_call.1} parent=1 // pred_check_branch
      %31 = sbr.rel (0) target = $region33
    $region32: #{tpu_custom_call.1} parent=1 // pred_region
      _
    $region33: #{tpu_custom_call.1} parent=1 // pred_fallthru
      _
    // Predicated region
    $region34: #{tpu_custom_call.1} parent=1 // pred_check
      _
    $region35: #{tpu_custom_call.1} parent=1 // pred_check_branch
      %33 = sbr.rel (0) target = $region37
    $region36: #{tpu_custom_call.1} parent=1 // pred_region
      _
    $region37: #{tpu_custom_call.1} parent=1 // pred_fallthru
      _
    // Predicated region
    $region38: #{tpu_custom_call.1} parent=1 // pred_check
      _
    $region39: #{tpu_custom_call.1} parent=1 // pred_check_branch
      %35 = sbr.rel (0) target = $region41
    $region40: #{tpu_custom_call.1} parent=1 // pred_region
      _
    $region41: #{tpu_custom_call.1} parent=1 // pred_fallthru
      _
    %v37 = vld [vmem:[%s0] sm:$0xff]
    %v38 = vld [vmem:[%s0 + $0x8] sm:$0xff]
    %v39 = vpack.c.bf16 %v38, %v37
    %v40 = vld [vmem:[%s2] sm:$0xf]
    %v41 = vld [vmem:[%s2 + $0x4] sm:$0xf]
    %v42 = vld [vmem:[%s2 + $0x8] sm:$0xf]
    %v43 = vld [vmem:[%s2 + $0xc] sm:$0xf]
    %v44 = vld [vmem:[%s2 + $0x10] sm:$0xf]
    %v45 = vld [vmem:[%s2 + $0x14] sm:$0xf]
    %v46 = vld [vmem:[%s2 + $0x18] sm:$0xf]
    %v47 = vld [vmem:[%s2 + $0x1c] sm:$0xf]
    %v48 = vld [vmem:[%s3] sm:$0x1]
    %v50 = vperm.slane %v48, 0
    %v60 = vunpack.c.l.b16 %v40
    %v61 = vunpack.c.l.b16 %v41
    %v62 = vunpack.c.l.b16 %v42
    %v63 = vunpack.c.l.b16 %v43
    %v64 = vunpack.c.l.b16 %v44
    %v65 = vunpack.c.l.b16 %v45
    %v66 = vunpack.c.l.b16 %v46
    %v67 = vunpack.c.l.b16 %v47
    %v68 = vpack.c.b16 %v61, %v60
    %v69 = vpack.c.b16 %v63, %v62
    %v70 = vpack.c.b16 %v65, %v64
    %v71 = vpack.c.b16 %v67, %v66
    %vm76 = vcmask 523264
    %v78 = vsel %vm76, %v39, 0
    %80 = vmatpush.bf16.msra.mxu0 0
    %81 = vmatpush.bf16.msra.mxu0 0
    %82 = vmatpush.bf16.msra.mxu0 0
    %83 = vmatpush.bf16.msra.mxu0 0
    %84 = vmatpush.bf16.msra.mxu0 %v71
    %85 = vmatpush.bf16.msra.mxu0 %v70
    %86 = vmatpush.bf16.msra.mxu0 %v69
    %87 = vmatpush.bf16.msra.mxu0 %v68
    %88 = vmatmul.bf16.gmra.mxu0 %v78
    %v89 = vpop.f32.mrf.mxu0
    %v90 = vadd.f32 %v50, %v89
    %v91 = vpop.f32.mrf.mxu0
    %v92 = vadd.f32 %v50, %v91
    %93 = vdwg.mxu0
    %v94 = vmax.f32 %v90, 0.0
    %v95 = vmax.f32 %v92, 0.0
    %v96 = vpack.c.bf16 %v95, %v94
    %v97 = vld [vmem:[%s4] sm:$0xf]
    %v98 = vld [vmem:[%s4 + $0x4] sm:$0xf]
    %v99 = vld [vmem:[%s4 + $0x8] sm:$0xf]
    %v100 = vld [vmem:[%s4 + $0xc] sm:$0xf]
    %v101 = vld [vmem:[%s4 + $0x10] sm:$0xf]
    %v102 = vld [vmem:[%s4 + $0x14] sm:$0xf]
    %v103 = vld [vmem:[%s4 + $0x18] sm:$0xf]
    %v104 = vld [vmem:[%s4 + $0x1c] sm:$0xf]
    %v105 = vld [vmem:[%s4 + $0x20] sm:$0xf]
    %v106 = vld [vmem:[%s4 + $0x24] sm:$0xf]
    %v107 = vld [vmem:[%s4 + $0x28] sm:$0xf]
    %v108 = vld [vmem:[%s4 + $0x2c] sm:$0xf]
    %v109 = vld [vmem:[%s4 + $0x30] sm:$0xf]
    %v110 = vld [vmem:[%s4 + $0x34] sm:$0xf]
    %v111 = vld [vmem:[%s4 + $0x38] sm:$0xf]
    %v112 = vld [vmem:[%s4 + $0x3c] sm:$0xf]
    %v113 = vld [vmem:[%s5] sm:$0x1]
    %v115 = vperm.slane %v113, 0
    %v133 = vunpack.c.l.b16 %v97
    %v134 = vunpack.c.l.b16 %v98
    %v135 = vunpack.c.l.b16 %v99
    %v136 = vunpack.c.l.b16 %v100
    %v137 = vunpack.c.l.b16 %v101
    %v138 = vunpack.c.l.b16 %v102
    %v139 = vunpack.c.l.b16 %v103
    %v140 = vunpack.c.l.b16 %v104
    %v141 = vunpack.c.l.b16 %v105
    %v142 = vunpack.c.l.b16 %v106
    %v143 = vunpack.c.l.b16 %v107
    %v144 = vunpack.c.l.b16 %v108
    %v145 = vunpack.c.l.b16 %v109
    %v146 = vunpack.c.l.b16 %v110
    %v147 = vunpack.c.l.b16 %v111
    %v148 = vunpack.c.l.b16 %v112
    %v149 = vpack.c.b16 %v134, %v133
    %v150 = vpack.c.b16 %v136, %v135
    %v151 = vpack.c.b16 %v138, %v137
    %v152 = vpack.c.b16 %v140, %v139
    %v153 = vpack.c.b16 %v142, %v141
    %v154 = vpack.c.b16 %v144, %v143
    %v155 = vpack.c.b16 %v146, %v145
    %v156 = vpack.c.b16 %v148, %v147
    %165 = vmatpush.bf16.msra.mxu0 %v156
    %166 = vmatpush.bf16.msra.mxu0 %v155
    %167 = vmatpush.bf16.msra.mxu0 %v154
    %168 = vmatpush.bf16.msra.mxu0 %v153
    %169 = vmatpush.bf16.msra.mxu0 %v152
    %170 = vmatpush.bf16.msra.mxu0 %v151
    %171 = vmatpush.bf16.msra.mxu0 %v150
    %172 = vmatpush.bf16.msra.mxu0 %v149
    %173 = vmatmul.bf16.gmra.mxu0 %v96
    %v174 = vpop.f32.mrf.mxu0
    %v175 = vadd.f32 %v115, %v174
    %v176 = vpop.f32.mrf.mxu0
    %v177 = vadd.f32 %v115, %v176
    %178 = vdwg.mxu0
    %v179 = vmul.f32 %v175, 0.5
    %v180 = vmul.f32 %v177, 0.5
    %v181 = vmul.f32 %v179, 1.442695
    %v182 = vpow.pop %v181
    %v183 = vmul.f32 %v180, 1.442695
    %v184 = vpow.pop %v183
    %v185 = vld [vmem:[%s1] sm:$0xff]
    %v186 = vld [vmem:[%s1 + $0x8] sm:$0xff]
    %189 = vrot.lane.b32.xlu0 %v185, 20
    %v190 = vpop.permute.xlu0 %189
    %191 = vrot.lane.b32.xlu0 %v186, 20
    %v192 = vpop.permute.xlu0 %191
    %v195 = vmul.f32 %v182, %v190
    %v196 = vmul.f32 %v184, %v192
    %199 = vrot.lane.b32.xlu0 %v195, 108
    %v200 = vpop.permute.xlu0 %199
    %201 = vrot.lane.b32.xlu0 %v196, 108
    %v202 = vpop.permute.xlu0 %201
    %v205 = vadd.f32 %v175, %v200
    %v206 = vadd.f32 %v177, %v202
    %v207 = vpack.c.bf16 %v206, %v205
    %v208 = vld [vmem:[%s6] sm:$0xf]
    %v209 = vld [vmem:[%s6 + $0x4] sm:$0xf]
    %v210 = vld [vmem:[%s6 + $0x8] sm:$0x3]
    %v211 = vld [vmem:[%s7] sm:$0x1]
    %v213 = vperm.slane %v211, 0
    %v218 = vunpack.c.l.b16 %v208
    %v219 = vunpack.c.l.b16 %v209
    %v220 = vunpack.c.l.b16 %v210
    %v221 = vpack.c.b16 %v219, %v218
    %v222 = vpack.c.b16 %v220, %v220
    %vm224 = vcmask 162816
    %v226 = vsel %vm224, %v207, 0
    %vm228 = vcmask 1041408
    %v230 = vsel %vm228, %v222, 0
    %232 = vmatpush.bf16.msra.mxu0 0
    %233 = vmatpush.bf16.msra.mxu0 0
    %234 = vmatpush.bf16.msra.mxu0 0
    %235 = vmatpush.bf16.msra.mxu0 0
    %236 = vmatpush.bf16.msra.mxu0 0
    %237 = vmatpush.bf16.msra.mxu0 0
    %238 = vmatpush.bf16.msra.mxu0 %v230
    %239 = vmatpush.bf16.msra.mxu0 %v221
    %240 = vmatmul.bf16.gmra.mxu0 %v226
    %v241 = vpop.f32.mrf.mxu0
    %v242 = vadd.f32 %v213, %v241
    %v243 = vpop.f32.mrf.mxu0
    %v244 = vadd.f32 %v213, %v243
    %245 = vdwg.mxu0
    %v246 = vmax.f32 %v242, 0.0
    %v247 = vmax.f32 %v244, 0.0
    %v248 = vpack.c.bf16 %v247, %v246
    %v249 = vld [vmem:[%s8] sm:$0xf]
    %v250 = vld [vmem:[%s8 + $0x4] sm:$0xf]
    %v251 = vld [vmem:[%s8 + $0x8] sm:$0xf]
    %v252 = vld [vmem:[%s8 + $0xc] sm:$0xf]
    %v253 = vld [vmem:[%s8 + $0x10] sm:$0xf]
    %v254 = vld [vmem:[%s8 + $0x14] sm:$0xf]
    %v255 = vld [vmem:[%s8 + $0x18] sm:$0xf]
    %v256 = vld [vmem:[%s8 + $0x1c] sm:$0xf]
    %v257 = vld [vmem:[%s8 + $0x20] sm:$0xf]
    %v258 = vld [vmem:[%s8 + $0x24] sm:$0xf]
    %v259 = vld [vmem:[%s8 + $0x28] sm:$0xf]
    %v260 = vld [vmem:[%s8 + $0x2c] sm:$0xf]
    %v261 = vld [vmem:[%s8 + $0x30] sm:$0xf]
    %v262 = vld [vmem:[%s8 + $0x34] sm:$0xf]
    %v263 = vld [vmem:[%s8 + $0x38] sm:$0xf]
    %v264 = vld [vmem:[%s8 + $0x3c] sm:$0xf]
    %v265 = vld [vmem:[%s9] sm:$0x1]
    %v267 = vperm.slane %v265, 0
    %v285 = vunpack.c.l.b16 %v249
    %v286 = vunpack.c.l.b16 %v250
    %v287 = vunpack.c.l.b16 %v251
    %v288 = vunpack.c.l.b16 %v252
    %v289 = vunpack.c.l.b16 %v253
    %v290 = vunpack.c.l.b16 %v254
    %v291 = vunpack.c.l.b16 %v255
    %v292 = vunpack.c.l.b16 %v256
    %v293 = vunpack.c.l.b16 %v257
    %v294 = vunpack.c.l.b16 %v258
    %v295 = vunpack.c.l.b16 %v259
    %v296 = vunpack.c.l.b16 %v260
    %v297 = vunpack.c.l.b16 %v261
    %v298 = vunpack.c.l.b16 %v262
    %v299 = vunpack.c.l.b16 %v263
    %v300 = vunpack.c.l.b16 %v264
    %v301 = vpack.c.b16 %v286, %v285
    %v302 = vpack.c.b16 %v288, %v287
    %v303 = vpack.c.b16 %v290, %v289
    %v304 = vpack.c.b16 %v292, %v291
    %v305 = vpack.c.b16 %v294, %v293
    %v306 = vpack.c.b16 %v296, %v295
    %v307 = vpack.c.b16 %v298, %v297
    %v308 = vpack.c.b16 %v300, %v299
    %317 = vmatpush.bf16.msra.mxu0 %v308
    %318 = vmatpush.bf16.msra.mxu0 %v307
    %319 = vmatpush.bf16.msra.mxu0 %v306
    %320 = vmatpush.bf16.msra.mxu0 %v305
    %321 = vmatpush.bf16.msra.mxu0 %v304
    %322 = vmatpush.bf16.msra.mxu0 %v303
    %323 = vmatpush.bf16.msra.mxu0 %v302
    %324 = vmatpush.bf16.msra.mxu0 %v301
    %325 = vmatmul.bf16.gmra.mxu0 %v248
    %v326 = vpop.f32.mrf.mxu0
    %v327 = vadd.f32 %v267, %v326
    %v328 = vpop.f32.mrf.mxu0
    %v329 = vadd.f32 %v267, %v328
    %330 = vdwg.mxu0
    %v331 = vxor.u32 %v327, 2147483648
    %v332 = vxor.u32 %v329, 2147483648
    %v333 = vmul.f32 %v331, 1.442695
    %v334 = vpow.pop %v333
    %v335 = vmul.f32 %v332, 1.442695
    %v336 = vpow.pop %v335
    %v337 = vadd.f32 %v334, 1.0
    %v338 = vadd.f32 %v336, 1.0
    %v339 = vrcp.pop %v337
    %v340 = vmul.f32 %v337, %v339
    %v341 = vsub.f32 1.0, %v340
    %v342 = vmul.f32 %v339, %v341
    %v343 = vadd.f32 %v339, %v342
    %vm344 = vweird.f32 %v337
    %vm345 = vweird.f32 %v339
    %vm346 = vmor %vm344, %vm345
    %v347 = vsel %vm346, %v339, %v343
    %v348 = vand.u32 2147483647, %v337
    %vm349 = vcmp.eq.f32.partialorder %v348, 8.507059e+37
    %v350 = vand.u32 %v337, 2147483648
    %v351 = vor.u32 1.1754944e-38, %v350
    %v352 = vsel %vm349, %v351, %v347
    %v353 = vmul.f32 1.0, %v352
    %v354 = vrcp.pop %v338
    %v355 = vmul.f32 %v338, %v354
    %v356 = vsub.f32 1.0, %v355
    %v357 = vmul.f32 %v354, %v356
    %v358 = vadd.f32 %v354, %v357
    %vm359 = vweird.f32 %v338
    %vm360 = vweird.f32 %v354
    %vm361 = vmor %vm359, %vm360
    %v362 = vsel %vm361, %v354, %v358
    %v363 = vand.u32 2147483647, %v338
    %vm364 = vcmp.eq.f32.partialorder %v363, 8.507059e+37
    %v365 = vand.u32 %v338, 2147483648
    %v366 = vor.u32 1.1754944e-38, %v365
    %v367 = vsel %vm364, %v366, %v362
    %v368 = vmul.f32 1.0, %v367
    %v369 = vpack.c.bf16 %v353, %v353
    %v370 = vpack.c.bf16 %v368, %v368
    %v371 = vpack.c.bf16 %v175, %v175
    %v372 = vpack.c.bf16 %v177, %v177
    %v375 = vunpack.c.l.b16 %v369
    %v376 = vunpack.c.l.b16 %v370
    %v377 = vpack.c.b16 %v376, %v375
    %v380 = vunpack.c.l.b16 %v371
    %v381 = vunpack.c.l.b16 %v372
    %v382 = vpack.c.b16 %v381, %v380
    %383 = vrot.lane.b32.xlu0 %v382, 64
    %v384 = vpop.permute.xlu0 %383
    %v387 = vsel %vm76, %v377, %v384
    %vm388 = vcmask 850944
    %v390 = vsel %vm388, %v387, 0
    %v392 = vunpack.c.l.b16 %v390
    %v393 = vunpack.c.h.b16 %v390
    %v394 = vpack.c.b16 %v392, %v392
    %v395 = vpack.c.b16 %v393, %v393
    %398 = vst [vmem:[#allocation2] sm:$0xf] %v394
    %399 = vst [vmem:[#allocation2 + $0x4] sm:$0xf] %v395
    // Predicated region
    $region42: #{tpu_custom_call.1} parent=1 // pred_check
      _
    $region43: #{tpu_custom_call.1} parent=1 // pred_check_branch
      %401 = sbr.rel (0) target = $region45
    $region44: #{tpu_custom_call.1} parent=1 // pred_region
      %403 = vsyncadd [#allocation3], 0
      %s404 = sshll.u32 [#allocation2], 4
      %s405 = int_to_ptr.vmem [resolvable:$true] %s404
      %s406 = sshll.u32 %s10, 4
      %s407 = int_to_ptr.hbm [resolvable:$true] %s406
      %412 = dma.vmem_to_hbm [thread:$0]  %s405, 128, %s407, [#allocation3], 64, 64, 4
    $region45: #{tpu_custom_call.1} parent=1 // pred_fallthru
      _
    // Predicated region
    $region46: #{tpu_custom_call.1} parent=1 // pred_check
      _
    $region47: #{tpu_custom_call.1} parent=1 // pred_check_branch
      %414 = sbr.rel (0) target = $region49
    $region48: #{tpu_custom_call.1} parent=1 // pred_region
      %416 = dma.done [#allocation3], 128
    $region49: #{tpu_custom_call.1} parent=1 // pred_fallthru
      _
    %417 = vsyncpa [#allocation3], 1

</llo_original>
